<compile_context>
chip_gen: v5e
topology: v5e:2x2
jax: 0.10.0
libtpu: 0.0.40
codegen_flags: <defaults>
</compile_context>

<pallas_src>
import functools
import math

import jax
import jax.numpy as jnp
from jax.experimental import pallas as pl
from jax.experimental.pallas import tpu as pltpu


def _round_up(x, m):
    return ((x + m - 1) // m) * m


def _numnodes_kernel(mask_ref, p_ref, o_ref, *, n_chunks, chunk):
    # mask_ref: (n_nodes_pad, TILE_B) bf16
    # p_ref   : (nf, 4) f32  — columns [w1/29 | b1 | w2 | b2]
    # o_ref   : (1, TILE_B) f32
    p = p_ref[...]
    w1 = p[:, 0:1]          # (nf, 1), already scaled by 1/29
    b1 = p[:, 1:2]          # (nf, 1)
    w2 = p[:, 2:3]          # (nf, 1)
    b2 = p[0:1, 3:4]        # (1, 1)

    @pl.loop(0, n_chunks)
    def _(c):
        off = pl.multiple_of(c * chunk, chunk)
        m = mask_ref[:, pl.ds(off, chunk)]                       # (rows, chunk) bf16
        # bf16 sum is exact for 0/1 masks with counts <= n_nodes; widen result only.
        nodes = jnp.sum(m, axis=0, keepdims=True).astype(jnp.float32)  # (1, chunk)
        # Linear(1 -> nf): broadcasted mul-add (VPU only, no MXU).
        h = nodes * w1 + b1                                      # (nf, chunk) f32
        # SiLU — sigmoid goes to the EUP slot.
        h = h * jax.nn.sigmoid(h)
        # Linear(nf -> 1): VPU multiply + sublane reduce.
        out = jnp.sum(h * w2, axis=0, keepdims=True) + b2        # (1, chunk)
        o_ref[:, pl.ds(off, chunk)] = out


@functools.partial(jax.jit, static_argnames=("n_nodes", "tile_b"))
def numnodes_forward(node_mask, n_nodes, params, tile_b=8192):
    """node_mask: (B * n_nodes, 1) float (0/1). Returns (B,) float32."""
    w1, b1, w2, b2 = params  # shapes: (nf, 1), (nf,), (1, nf), (1,)
    nf = w1.shape[0]

    mask2d = node_mask.reshape(-1, n_nodes)                      # (B, n_nodes)
    B = mask2d.shape[0]

    # Lane-align the batch and clamp the tile to it (small-B friendly).
    tile_b_eff = min(tile_b, _round_up(B, 128))
    b_padded = _round_up(B, tile_b_eff)
    # Pad node rows to the bf16 sublane pack so the axis-0 reduce is unmasked.
    rows = _round_up(n_nodes, 16)

    # Single fused transpose + cast + pad (batch on lanes, bf16 in HBM).
    # TODO(synk): ideally the producer emits node_mask already as (n_nodes, B) bf16.
    mask_t = jnp.pad(
        mask2d.T.astype(jnp.bfloat16),
        ((0, rows - n_nodes), (0, b_padded - B)),
    )

    # Pack params into one (nf, 4) f32 array: [w1/29 | b1 | w2 | b2].
    packed = jnp.concatenate(
        [
            w1.reshape(nf, 1) * (1.0 / 29.0),
            b1.reshape(nf, 1),
            w2.reshape(nf, 1),
            jnp.broadcast_to(b2.reshape(1, 1), (nf, 1)),
        ],
        axis=1,
    ).astype(jnp.float32)

    # Inner lane-chunk sized so the (nf, chunk) f32 hidden stays in ~16 vregs.
    chunk = max(128, min(512, ((16384 // max(nf, 1)) // 128) * 128))
    chunk = math.gcd(chunk, tile_b_eff)
    n_chunks = tile_b_eff // chunk

    grid = (b_padded // tile_b_eff,)
    out = pl.pallas_call(
        functools.partial(_numnodes_kernel, n_chunks=n_chunks, chunk=chunk),
        out_shape=jax.ShapeDtypeStruct((1, b_padded), jnp.float32),
        grid_spec=pltpu.PrefetchScalarGridSpec(
            num_scalar_prefetch=0,
            grid=grid,
            in_specs=[
                # Mask tile: new batch slab each grid step (double-buffered).
                pl.BlockSpec((rows, tile_b_eff), lambda i: (0, i)),
                # Packed params: constant block index -> DMA'd once, resident.
                pl.BlockSpec((nf, 4), lambda i: (0, 0)),
            ],
            out_specs=pl.BlockSpec((1, tile_b_eff), lambda i: (0, i)),
        ),
        compiler_params=pltpu.CompilerParams(
            dimension_semantics=("parallel",),
        ),
    )(mask_t, packed)
    return out[0, :B]


def init_params(key, nf=32):
    """Deterministic PyTorch-style Linear init: U(-1/sqrt(fan_in), 1/sqrt(fan_in))."""
    k1, k2, k3, k4 = jax.random.split(key, 4)
    bound1 = 1.0  # fan_in = 1
    w1 = jax.random.uniform(k1, (nf, 1), jnp.float32, -bound1, bound1)
    b1 = jax.random.uniform(k2, (nf,), jnp.float32, -bound1, bound1)
    bound2 = 1.0 / float(math.sqrt(nf))
    w2 = jax.random.uniform(k3, (1, nf), jnp.float32, -bound2, bound2)
    b2 = jax.random.uniform(k4, (1,), jnp.float32, -bound2, bound2)
    return (w1, b1, w2, b2)


def _reference(node_mask, n_nodes, params):
    w1, b1, w2, b2 = params
    m = node_mask.reshape(-1, n_nodes)
    s = jnp.sum(m, axis=1, keepdims=True) / 29.0
    h = s @ w1.T + b1
    h = h * jax.nn.sigmoid(h)
    return (h @ w2.T + b2)[:, 0]


if __name__ == "__main__":
    key = jax.random.PRNGKey(0)
    kp, km = jax.random.split(key)

    B, n_nodes, nf = 2, 8, 32
    params = init_params(kp, nf=nf)

    # node_mask: (B * n_nodes, 1) of 0/1 floats, like the QM9 node mask.
    node_mask = (jax.random.uniform(km, (B * n_nodes, 1)) > 0.3).astype(jnp.float32)

    out = numnodes_forward(node_mask, n_nodes, params)
    out = jax.block_until_ready(out)

    ref = _reference(node_mask, n_nodes, params)
    assert out.shape == (B,)
    assert jnp.allclose(out, ref, atol=1e-5, rtol=1e-5)

    print("KERNEL_OK")
</pallas_src>

<mosaic_0001>
module attributes {stable_mosaic.version = 11 : i64} {
  func.func @_numnodes_kernel(%arg0: i32, %arg1: memref<16x128xbf16, #tpu.memory_space<vmem>>, %arg2: memref<32x4xf32, #tpu.memory_space<vmem>>, %arg3: memref<1x128xf32, #tpu.memory_space<vmem>>) attributes {dimension_semantics = [#tpu.dimension_semantics<parallel>], iteration_bounds = array<i64: 1>, scalar_prefetch = 0 : i64, scratch_operands = 0 : i64, tpu.core_type = #tpu.core_type<tc>, window_params = [{transform_indices = @transform_0, window_bounds = array<i64: 16, 128>}, {pipeline_mode = #tpu.pipeline_mode<synchronous>, transform_indices = @transform_1, window_bounds = array<i64: 32, 4>}, {transform_indices = @transform_2, window_bounds = array<i64: 1, 128>}]} {
    %c0 = arith.constant 0 : index
    %c0_0 = arith.constant 0 : index
    %0 = vector.load %arg2[%c0, %c0_0] : memref<32x4xf32, #tpu.memory_space<vmem>>, vector<32x4xf32>
    %1 = vector.extract_strided_slice %0 {offsets = [0, 0], sizes = [32, 1], strides = [1, 1]} : vector<32x4xf32> to vector<32x1xf32>
    %2 = vector.extract_strided_slice %0 {offsets = [0, 1], sizes = [32, 1], strides = [1, 1]} : vector<32x4xf32> to vector<32x1xf32>
    %3 = vector.extract_strided_slice %0 {offsets = [0, 2], sizes = [32, 1], strides = [1, 1]} : vector<32x4xf32> to vector<32x1xf32>
    %4 = vector.extract_strided_slice %0 {offsets = [0, 3], sizes = [1, 1], strides = [1, 1]} : vector<32x4xf32> to vector<1x1xf32>
    %c0_i32 = arith.constant 0 : i32
    %c1_i32 = arith.constant 1 : i32
    %5 = arith.muli %c0_i32, %c1_i32 : i32
    %c0_i32_1 = arith.constant 0 : i32
    %6 = arith.addi %c0_i32_1, %5 : i32
    %c128_i32 = arith.constant 128 : i32
    %7 = arith.muli %6, %c128_i32 : i32
    %8 = tpu.assume_multiple %7, 128 : i32
    %c0_2 = arith.constant 0 : index
    %9 = arith.index_cast %8 : i32 to index
    %10 = vector.load %arg1[%c0_2, %9] : memref<16x128xbf16, #tpu.memory_space<vmem>>, vector<16x128xbf16>
    %11 = arith.extf %10 : vector<16x128xbf16> to vector<16x128xf32>
    %cst = arith.constant dense<0.000000e+00> : vector<128xf32>
    %12 = vector.multi_reduction <add>, %11, %cst [0] : vector<16x128xf32> to vector<128xf32>
    %13 = vector.shape_cast %12 : vector<128xf32> to vector<1x128xf32>
    %14 = arith.truncf %13 : vector<1x128xf32> to vector<1x128xbf16>
    %15 = arith.extf %14 : vector<1x128xbf16> to vector<1x128xf32>
    %16 = vector.broadcast %15 : vector<1x128xf32> to vector<32x128xf32>
    %17 = vector.broadcast %1 : vector<32x1xf32> to vector<32x128xf32>
    %18 = arith.mulf %16, %17 : vector<32x128xf32>
    %19 = vector.broadcast %2 : vector<32x1xf32> to vector<32x128xf32>
    %20 = arith.addf %18, %19 : vector<32x128xf32>
    %21 = arith.negf %20 : vector<32x128xf32>
    %22 = math.exp %21 : vector<32x128xf32>
    %cst_3 = arith.constant 1.000000e+00 : f32
    %23 = vector.broadcast %cst_3 : f32 to vector<32x128xf32>
    %24 = arith.addf %23, %22 : vector<32x128xf32>
    %25 = arith.divf %23, %24 : vector<32x128xf32>
    %26 = arith.mulf %20, %25 : vector<32x128xf32>
    %27 = vector.broadcast %3 : vector<32x1xf32> to vector<32x128xf32>
    %28 = arith.mulf %26, %27 : vector<32x128xf32>
    %cst_4 = arith.constant dense<0.000000e+00> : vector<128xf32>
    %29 = vector.multi_reduction <add>, %28, %cst_4 [0] : vector<32x128xf32> to vector<128xf32>
    %30 = vector.shape_cast %29 : vector<128xf32> to vector<1x128xf32>
    %31 = vector.broadcast %4 : vector<1x1xf32> to vector<1x128xf32>
    %32 = arith.addf %30, %31 : vector<1x128xf32>
    %c0_5 = arith.constant 0 : index
    %33 = arith.index_cast %8 : i32 to index
    %34 = vector.load %arg3[%c0_5, %33] : memref<1x128xf32, #tpu.memory_space<vmem>>, vector<1x128xf32>
    tpu.vector_store %arg3[%c0_5, %33], %32 {strides = array<i32>} : memref<1x128xf32, #tpu.memory_space<vmem>>, vector<1x128xf32>,
    %c1_i32_6 = arith.constant 1 : i32
    return
  }
  func.func @transform_0(%arg0: i32) -> (i32, i32) {
    %c0_i32 = arith.constant 0 : i32
    %c0_i32_0 = arith.constant 0 : i32
    return %c0_i32, %arg0 : i32, i32
  }
  func.func @transform_1(%arg0: i32) -> (i32, i32) {
    %c0_i32 = arith.constant 0 : i32
    %c0_i32_0 = arith.constant 0 : i32
    %c0_i32_1 = arith.constant 0 : i32
    return %c0_i32, %c0_i32_0 : i32, i32
  }
  func.func @transform_2(%arg0: i32) -> (i32, i32) {
    %c0_i32 = arith.constant 0 : i32
    %c0_i32_0 = arith.constant 0 : i32
    return %c0_i32, %arg0 : i32, i32
  }
}

</mosaic_0001>

<llo_original>
// kernel: numnodes_forward.1
$region0: #{numnodes_forward.1}
  #allocation0 [shape = 'u32[]', space=smem, size = 0x4, offset = 0x4, fixed_abs, tag = 'smem constant byte address 0x4 - core index']
  #allocation1 [shape = 'u32[72,128]{1,0:T(1,128)}', space=vmem, size = 0x9000, scoped, tag = 'internal scratch']
  %s0 = inlined_call_operand.vmem [shape: bf16[16,128], index: 0, kind: input, shape index: {}]
  %s1 = inlined_call_operand.vmem [shape: f32[32,4], index: 1, kind: input, shape index: {}]
  %s2 = inlined_call_operand.vmem [shape: f32[1,128], index: 2, kind: output, shape index: {}]
  %s3 = sld [smem:[#allocation0]]
  $region18: #{numnodes_forward.1} parent=0
    _
  %s5 = ssub.s32 1, %s3
  %s6 = scalar_select 0, %s5, %s3
  // Predicated region
  $region2: #{numnodes_forward.1} parent=0 // pred_check
    _
  $region3: #{numnodes_forward.1} parent=0 // pred_check_branch
    %8 = sbr.rel (0) target = $region5
  $region4: #{numnodes_forward.1} parent=0 // pred_region
    _
  $region5: #{numnodes_forward.1} parent=0 // pred_fallthru
    _
  // Predicated region
  $region6: #{numnodes_forward.1} parent=0 // pred_check
    _
  $region7: #{numnodes_forward.1} parent=0 // pred_check_branch
    %10 = sbr.rel (0) target = $region9
  $region8: #{numnodes_forward.1} parent=0 // pred_region
    _
  $region9: #{numnodes_forward.1} parent=0 // pred_fallthru
    _
  %v11 = vld [vmem:[%s1] sm:$0xff]
  %v12 = vld [vmem:[%s1 + $0x8] sm:$0xff]
  %v13 = vld [vmem:[%s1 + $0x10] sm:$0xff]
  %v14 = vld [vmem:[%s1 + $0x18] sm:$0xff]
  %v15 = vld [vmem:[%s0] sm:$0xf]
  %v16 = vld [vmem:[%s0 + $0x4] sm:$0xf]
  %v17 = vunpack.c.l.bf16 %v15
  %v18 = vunpack.c.l.bf16 %v16
  %v19 = vadd.f32 %v17, %v18
  %v20 = vrot.slane %v19, 4
  %v21 = vadd.f32 %v19, %v20
  %v22 = vrot.slane %v21, 2
  %v23 = vadd.f32 %v21, %v22
  %v24 = vrot.slane %v23, 1
  %v25 = vadd.f32 %v23, %v24
  %v26 = vpack.c.bf16 %v25, %v25
  %v27 = vunpack.c.l.bf16 %v26
  %29 = vset.pattern.permute.xlu0 0
  %30 = vperm.xlu0 %29, %v11
  %v31 = vpop.permute.xlu0 %30
  %34 = vset.pattern.permute.xlu0 0
  %35 = vperm.xlu0 %34, %v12
  %v36 = vpop.permute.xlu0 %35
  %39 = vset.pattern.permute.xlu0 0
  %40 = vperm.xlu0 %39, %v13
  %v41 = vpop.permute.xlu0 %40
  %44 = vset.pattern.permute.xlu0 0
  %45 = vperm.xlu0 %44, %v14
  %v46 = vpop.permute.xlu0 %45
  %v48 = vmul.f32 %v27, %v31
  %v49 = vmul.f32 %v27, %v36
  %v50 = vmul.f32 %v27, %v41
  %v51 = vmul.f32 %v27, %v46
  %52 = vset.pattern.permute.xlu0 1
  %53 = vperm.xlu0 %52, %v11
  %v54 = vpop.permute.xlu0 %53
  %56 = vset.pattern.permute.xlu0 1
  %57 = vperm.xlu0 %56, %v12
  %v58 = vpop.permute.xlu0 %57
  %60 = vset.pattern.permute.xlu0 1
  %61 = vperm.xlu0 %60, %v13
  %v62 = vpop.permute.xlu0 %61
  %64 = vset.pattern.permute.xlu0 1
  %65 = vperm.xlu0 %64, %v14
  %v66 = vpop.permute.xlu0 %65
  %v68 = vadd.f32 %v48, %v54
  %v69 = vadd.f32 %v49, %v58
  %v70 = vadd.f32 %v50, %v62
  %v71 = vadd.f32 %v51, %v66
  %v72 = vxor.u32 %v68, 2147483648
  %v73 = vxor.u32 %v69, 2147483648
  %v74 = vxor.u32 %v70, 2147483648
  %v75 = vxor.u32 %v71, 2147483648
  %v76 = vmul.f32 %v72, 1.442695
  %v77 = vpow.pop %v76
  %v78 = vmul.f32 %v73, 1.442695
  %v79 = vpow.pop %v78
  %v80 = vmul.f32 %v74, 1.442695
  %v81 = vpow.pop %v80
  %v82 = vmul.f32 %v75, 1.442695
  %v83 = vpow.pop %v82
  %v84 = vadd.f32 %v77, 1.0
  %v85 = vadd.f32 %v79, 1.0
  %v86 = vadd.f32 %v81, 1.0
  %v87 = vadd.f32 %v83, 1.0
  %v88 = vrcp.pop %v84
  %v89 = vmul.f32 %v84, %v88
  %v90 = vsub.f32 1.0, %v89
  %v91 = vmul.f32 %v88, %v90
  %v92 = vadd.f32 %v88, %v91
  %vm93 = vweird.f32 %v84
  %vm94 = vweird.f32 %v88
  %vm95 = vmor %vm93, %vm94
  %v96 = vsel %vm95, %v88, %v92
  %v97 = vand.u32 2147483647, %v84
  %vm98 = vcmp.eq.f32.partialorder %v97, 8.507059e+37
  %v99 = vand.u32 %v84, 2147483648
  %v100 = vor.u32 1.1754944e-38, %v99
  %v101 = vsel %vm98, %v100, %v96
  %v102 = vmul.f32 1.0, %v101
  %v103 = vrcp.pop %v85
  %v104 = vmul.f32 %v85, %v103
  %v105 = vsub.f32 1.0, %v104
  %v106 = vmul.f32 %v103, %v105
  %v107 = vadd.f32 %v103, %v106
  %vm108 = vweird.f32 %v85
  %vm109 = vweird.f32 %v103
  %vm110 = vmor %vm108, %vm109
  %v111 = vsel %vm110, %v103, %v107
  %v112 = vand.u32 2147483647, %v85
  %vm113 = vcmp.eq.f32.partialorder %v112, 8.507059e+37
  %v114 = vand.u32 %v85, 2147483648
  %v115 = vor.u32 1.1754944e-38, %v114
  %v116 = vsel %vm113, %v115, %v111
  %v117 = vmul.f32 1.0, %v116
  %v118 = vrcp.pop %v86
  %v119 = vmul.f32 %v86, %v118
  %v120 = vsub.f32 1.0, %v119
  %v121 = vmul.f32 %v118, %v120
  %v122 = vadd.f32 %v118, %v121
  %vm123 = vweird.f32 %v86
  %vm124 = vweird.f32 %v118
  %vm125 = vmor %vm123, %vm124
  %v126 = vsel %vm125, %v118, %v122
  %v127 = vand.u32 2147483647, %v86
  %vm128 = vcmp.eq.f32.partialorder %v127, 8.507059e+37
  %v129 = vand.u32 %v86, 2147483648
  %v130 = vor.u32 1.1754944e-38, %v129
  %v131 = vsel %vm128, %v130, %v126
  %v132 = vmul.f32 1.0, %v131
  %v133 = vrcp.pop %v87
  %v134 = vmul.f32 %v87, %v133
  %v135 = vsub.f32 1.0, %v134
  %v136 = vmul.f32 %v133, %v135
  %v137 = vadd.f32 %v133, %v136
  %vm138 = vweird.f32 %v87
  %vm139 = vweird.f32 %v133
  %vm140 = vmor %vm138, %vm139
  %v141 = vsel %vm140, %v133, %v137
  %v142 = vand.u32 2147483647, %v87
  %vm143 = vcmp.eq.f32.partialorder %v142, 8.507059e+37
  %v144 = vand.u32 %v87, 2147483648
  %v145 = vor.u32 1.1754944e-38, %v144
  %v146 = vsel %vm143, %v145, %v141
  %v147 = vmul.f32 1.0, %v146
  %v148 = vmul.f32 %v68, %v102
  %v149 = vmul.f32 %v69, %v117
  %v150 = vmul.f32 %v70, %v132
  %v151 = vmul.f32 %v71, %v147
  %152 = vset.pattern.permute.xlu0 2
  %153 = vperm.xlu0 %152, %v11
  %v154 = vpop.permute.xlu0 %153
  %156 = vset.pattern.permute.xlu0 2
  %157 = vperm.xlu0 %156, %v12
  %v158 = vpop.permute.xlu0 %157
  %160 = vset.pattern.permute.xlu0 2
  %161 = vperm.xlu0 %160, %v13
  %v162 = vpop.permute.xlu0 %161
  %164 = vset.pattern.permute.xlu0 2
  %165 = vperm.xlu0 %164, %v14
  %v166 = vpop.permute.xlu0 %165
  %v168 = vmul.f32 %v148, %v154
  %v169 = vmul.f32 %v149, %v158
  %v170 = vmul.f32 %v150, %v162
  %v171 = vmul.f32 %v151, %v166
  %v172 = vadd.f32 %v168, %v169
  %v173 = vadd.f32 %v172, %v170
  %v174 = vadd.f32 %v173, %v171
  %v175 = vrot.slane %v174, 4
  %v176 = vadd.f32 %v174, %v175
  %v177 = vrot.slane %v176, 2
  %v178 = vadd.f32 %v176, %v177
  %v179 = vrot.slane %v178, 1
  %v180 = vadd.f32 %v178, %v179
  %181 = vset.pattern.permute.xlu0 3
  %182 = vperm.xlu0 %181, %v11
  %v183 = vpop.permute.xlu0 %182
  %v185 = vadd.f32 %v180, %v183
  %186 = vst [vmem:[%s2] sm:$0x1] %v185
  // Predicated region
  $region10: #{numnodes_forward.1} parent=0 // pred_check
    _
  $region11: #{numnodes_forward.1} parent=0 // pred_check_branch
    %188 = sbr.rel (0) target = $region13
  $region12: #{numnodes_forward.1} parent=0 // pred_region
    _
  $region13: #{numnodes_forward.1} parent=0 // pred_fallthru
    _
  // Predicated region
  $region14: #{numnodes_forward.1} parent=0 // pred_check
    _
  $region15: #{numnodes_forward.1} parent=0 // pred_check_branch
    %190 = sbr.rel (0) target = $region17
  $region16: #{numnodes_forward.1} parent=0 // pred_region
    _
  $region17: #{numnodes_forward.1} parent=0 // pred_fallthru
    _

</llo_original>
